<compile_context>
chip_gen: v7x
topology: tpu7x:2x2x1
jax: 0.10.0
libtpu: 0.0.40
codegen_flags: <defaults>
</compile_context>

<pallas_src>
import jax
import jax.numpy as jnp
from jax.experimental import pallas as pl
from jax.experimental.pallas import tpu as pltpu

EPS = 1e-5  # nn.LayerNorm default


def _round_up(x, m):
    return ((int(x) + m - 1) // m) * m


def _make_kernel(d_out):
    inv_d = float(1.0 / d_out)  # hoisted; avoids a divide per reduction

    def kernel(x_ref, a_ref, w_in_ref, w_attr_ref, p_ref, o_ref):
        # ---- network: two accumulating bf16 MXU matmuls, f32 accumulation --
        x = x_ref[...].astype(jnp.bfloat16)
        a = a_ref[...].astype(jnp.bfloat16)
        y = jnp.dot(x, w_in_ref[...], preferred_element_type=jnp.float32)
        y = y + jnp.dot(a, w_attr_ref[...], preferred_element_type=jnp.float32)
        y = y + p_ref[0:1, :]                          # bias (f32)

        # ---- norm: LayerNorm over the feature axis, f32 math ---------------
        mean = jnp.sum(y, axis=-1, keepdims=True) * inv_d
        centered = y - mean
        var = jnp.sum(centered * centered, axis=-1, keepdims=True) * inv_d
        y_hat = centered * jax.lax.rsqrt(var + EPS)
        out = y_hat * p_ref[1:2, :] + p_ref[2:3, :]    # gamma, beta

        o_ref[...] = out.astype(o_ref.dtype)

    return kernel


def compose_network_norm(node_input, node_attr, w_in, w_attr, b, gamma, beta,
                         *, tile_n=None, out_dtype=jnp.float32,
                         vmem_budget_bytes=24 << 20):
    N, d_in = node_input.shape
    _, d_attr = node_attr.shape
    d_out = w_in.shape[1]
    d_k = d_in + d_attr
    out_bytes = jnp.dtype(out_dtype).itemsize

    # ---- one-time prep outside the kernel (tiny, weights only) -------------
    w_in_bf = w_in.astype(jnp.bfloat16)
    w_attr_bf = w_attr.astype(jnp.bfloat16)
    params = jnp.concatenate(
        [b.reshape(1, d_out), gamma.reshape(1, d_out), beta.reshape(1, d_out)],
        axis=0).astype(jnp.float32)

    # ---- row tiling: derive the tile from a VMEM budget --------------------
    auto_tile = tile_n is None
    if auto_tile:
        # Per-row VMEM: double-buffered f32 inputs + double-buffered output
        # tile + f32 intermediate + bf16 cast temporaries (slack included).
        bytes_per_row = (2 * 4 * d_k           # x / attr tiles, 2 buffers
                         + 2 * out_bytes * d_out   # output tile, 2 buffers
                         + 4 * d_out               # f32 y intermediate
                         + 2 * d_k + 4 * d_out)    # bf16 casts / LN temps
        weight_bytes = 2 * (2 * d_k * d_out) + 2 * (3 * d_out * 4)
        budget = max(vmem_budget_bytes - weight_bytes, 1 << 20)
        tile_n = int(budget // bytes_per_row)
        tile_n = min(tile_n, 8192)
    tile_n = max(8, (int(tile_n) // 8) * 8)            # sublane-aligned
    tile_n = min(tile_n, _round_up(N, 8))              # never exceed problem
    if auto_tile and N >= 256:
        # Keep at least 2 grid steps so both v7x TensorCores get work.
        tile_n = min(tile_n, _round_up(pl.cdiv(N, 2), 8))
    n_tiles = pl.cdiv(N, tile_n)                       # partial last block OK

    cost = pl.CostEstimate(
        flops=2 * N * d_k * d_out + 8 * N * d_out,
        transcendentals=N,                             # one rsqrt per row
        bytes_accessed=(N * d_k * 4 + N * d_out * out_bytes
                        + 2 * d_k * d_out + 3 * d_out * 4))

    out = pl.pallas_call(
        _make_kernel(d_out),
        out_shape=jax.ShapeDtypeStruct((N, d_out), out_dtype),
        grid_spec=pltpu.PrefetchScalarGridSpec(
            num_scalar_prefetch=0,
            grid=(n_tiles,),
            in_specs=[
                pl.BlockSpec((tile_n, d_in),   lambda i: (i, 0)),  # x (f32)
                pl.BlockSpec((tile_n, d_attr), lambda i: (i, 0)),  # attr (f32)
                pl.BlockSpec((d_in, d_out),    lambda i: (0, 0)),  # W_in bf16
                pl.BlockSpec((d_attr, d_out),  lambda i: (0, 0)),  # W_attr bf16
                pl.BlockSpec((3, d_out),       lambda i: (0, 0)),  # b/gamma/beta
            ],
            out_specs=pl.BlockSpec((tile_n, d_out), lambda i: (i, 0)),
        ),
        compiler_params=pltpu.CompilerParams(
            dimension_semantics=("parallel",),
            vmem_limit_bytes=32 << 20),
        cost_estimate=cost,
    )(node_input, node_attr, w_in_bf, w_attr_bf, params)

    return out


def _reference(node_input, node_attr, w_in, w_attr, b, gamma, beta):
    # Full-f32 reference matching the PyTorch module semantics.
    y = node_input @ w_in + node_attr @ w_attr + b
    mean = jnp.mean(y, axis=-1, keepdims=True)
    var = jnp.mean((y - mean) ** 2, axis=-1, keepdims=True)
    return (y - mean) * jax.lax.rsqrt(var + EPS) * gamma + beta


if __name__ == "__main__":
    key = jax.random.PRNGKey(0)

    # ------------------- test 1: small, single tile (auto tile_n) -----------
    N, D_IN, D_ATTR, D_OUT = 16, 32, 32, 128
    k_x, k_a, k_w1, k_w2, k_b = jax.random.split(key, 5)

    node_input = jax.random.normal(k_x, (N, D_IN), dtype=jnp.float32)
    node_attr = jax.random.normal(k_a, (N, D_ATTR), dtype=jnp.float32)
    w_in = jax.random.normal(k_w1, (D_IN, D_OUT), dtype=jnp.float32) * 0.05
    w_attr = jax.random.normal(k_w2, (D_ATTR, D_OUT), dtype=jnp.float32) * 0.05
    b = jax.random.normal(k_b, (1, D_OUT), dtype=jnp.float32) * 0.01
    gamma = jnp.ones((1, D_OUT), dtype=jnp.float32)
    beta = jnp.zeros((1, D_OUT), dtype=jnp.float32)

    out = compose_network_norm(node_input, node_attr, w_in, w_attr, b,
                               gamma, beta)
    out = jax.block_until_ready(out)
    ref = _reference(node_input, node_attr, w_in, w_attr, b, gamma, beta)
    assert out.shape == (N, D_OUT)
    # bf16 matmul operands + f32 accumulation/LN -> loosened tolerance.
    assert jnp.allclose(out, ref, atol=5e-2, rtol=5e-2), "mismatch (test 1)"

    # --------- test 2: ragged N exercising the masked-partial-block path ----
    N2 = 200
    k_x2, k_a2, k_g2, k_b2 = jax.random.split(jax.random.PRNGKey(1), 4)
    node_input2 = jax.random.normal(k_x2, (N2, D_IN), dtype=jnp.float32)
    node_attr2 = jax.random.normal(k_a2, (N2, D_ATTR), dtype=jnp.float32)
    gamma2 = 1.0 + 0.1 * jax.random.normal(k_g2, (1, D_OUT), dtype=jnp.float32)
    beta2 = 0.1 * jax.random.normal(k_b2, (1, D_OUT), dtype=jnp.float32)

    out2 = compose_network_norm(node_input2, node_attr2, w_in, w_attr, b,
                                gamma2, beta2, tile_n=128)
    out2 = jax.block_until_ready(out2)
    ref2 = _reference(node_input2, node_attr2, w_in, w_attr, b, gamma2, beta2)
    assert out2.shape == (N2, D_OUT)
    assert jnp.allclose(out2, ref2, atol=5e-2, rtol=5e-2), "mismatch (test 2)"

    # --------- test 3: bf16 output path (dominant HBM stream halved) --------
    out3 = compose_network_norm(node_input2, node_attr2, w_in, w_attr, b,
                                gamma2, beta2, out_dtype=jnp.bfloat16)
    out3 = jax.block_until_ready(out3)
    assert out3.dtype == jnp.bfloat16 and out3.shape == (N2, D_OUT)
    assert jnp.allclose(out3.astype(jnp.float32), ref2,
                        atol=1e-1, rtol=1e-1), "mismatch (test 3)"

    # TODO(synk): the `batch is not None` branch (graph-wise BatchNorm using a
    # per-node batch index, i.e. segment statistics) is not implemented; only
    # the `batch=None` LayerNorm path is fused here.

    print("KERNEL_OK")
</pallas_src>

<mosaic_0001>
module attributes {stable_mosaic.version = 11 : i64} {
  func.func @kernel(%arg0: i32, %arg1: memref<16x32xf32, #tpu.memory_space<vmem>>, %arg2: memref<16x32xf32, #tpu.memory_space<vmem>>, %arg3: memref<32x128xbf16, #tpu.memory_space<vmem>>, %arg4: memref<32x128xbf16, #tpu.memory_space<vmem>>, %arg5: memref<3x128xf32, #tpu.memory_space<vmem>>, %arg6: memref<16x128xf32, #tpu.memory_space<vmem>>) attributes {dimension_semantics = [#tpu.dimension_semantics<parallel>], iteration_bounds = array<i64: 1>, scalar_prefetch = 0 : i64, scratch_operands = 0 : i64, tpu.core_type = #tpu.core_type<tc>, window_params = [{transform_indices = @transform_0, window_bounds = array<i64: 16, 32>}, {transform_indices = @transform_1, window_bounds = array<i64: 16, 32>}, {pipeline_mode = #tpu.pipeline_mode<synchronous>, transform_indices = @transform_2, window_bounds = array<i64: 32, 128>}, {pipeline_mode = #tpu.pipeline_mode<synchronous>, transform_indices = @transform_3, window_bounds = array<i64: 32, 128>}, {pipeline_mode = #tpu.pipeline_mode<synchronous>, transform_indices = @transform_4, window_bounds = array<i64: 3, 128>}, {transform_indices = @transform_5, window_bounds = array<i64: 16, 128>}]} {
    %c0 = arith.constant 0 : index
    %c0_0 = arith.constant 0 : index
    %0 = vector.load %arg1[%c0, %c0_0] : memref<16x32xf32, #tpu.memory_space<vmem>>, vector<16x32xf32>
    %1 = arith.truncf %0 : vector<16x32xf32> to vector<16x32xbf16>
    %c0_1 = arith.constant 0 : index
    %c0_2 = arith.constant 0 : index
    %2 = vector.load %arg2[%c0_1, %c0_2] : memref<16x32xf32, #tpu.memory_space<vmem>>, vector<16x32xf32>
    %3 = arith.truncf %2 : vector<16x32xf32> to vector<16x32xbf16>
    %c0_3 = arith.constant 0 : index
    %c0_4 = arith.constant 0 : index
    %4 = vector.load %arg3[%c0_3, %c0_4] : memref<32x128xbf16, #tpu.memory_space<vmem>>, vector<32x128xbf16>
    %cst = arith.constant dense<0.000000e+00> : vector<16x128xf32>
    %5 = tpu.matmul %1, %4, %cst {dimension_numbers = #tpu.dot_dimension_numbers<[1], [0], [0], [1], [0, 0, 1, 1], [], []>} : vector<16x32xbf16>, vector<32x128xbf16>, vector<16x128xf32> -> vector<16x128xf32>
    %c0_5 = arith.constant 0 : index
    %c0_6 = arith.constant 0 : index
    %6 = vector.load %arg4[%c0_5, %c0_6] : memref<32x128xbf16, #tpu.memory_space<vmem>>, vector<32x128xbf16>
    %cst_7 = arith.constant dense<0.000000e+00> : vector<16x128xf32>
    %7 = tpu.matmul %3, %6, %cst_7 {dimension_numbers = #tpu.dot_dimension_numbers<[1], [0], [0], [1], [0, 0, 1, 1], [], []>} : vector<16x32xbf16>, vector<32x128xbf16>, vector<16x128xf32> -> vector<16x128xf32>
    %8 = arith.addf %5, %7 : vector<16x128xf32>
    %c0_8 = arith.constant 0 : index
    %c0_9 = arith.constant 0 : index
    %9 = vector.load %arg5[%c0_8, %c0_9] : memref<3x128xf32, #tpu.memory_space<vmem>>, vector<1x128xf32>
    %10 = vector.broadcast %9 : vector<1x128xf32> to vector<16x128xf32>
    %11 = arith.addf %8, %10 : vector<16x128xf32>
    %cst_10 = arith.constant dense<0.000000e+00> : vector<16xf32>
    %12 = vector.multi_reduction <add>, %11, %cst_10 [1] : vector<16x128xf32> to vector<16xf32>
    %13 = vector.shape_cast %12 : vector<16xf32> to vector<16x1xf32>
    %cst_11 = arith.constant 7.812500e-03 : f32
    %14 = vector.broadcast %cst_11 : f32 to vector<16x1xf32>
    %15 = arith.mulf %13, %14 : vector<16x1xf32>
    %16 = vector.broadcast %15 : vector<16x1xf32> to vector<16x128xf32>
    %17 = arith.subf %11, %16 : vector<16x128xf32>
    %18 = arith.mulf %17, %17 : vector<16x128xf32>
    %cst_12 = arith.constant dense<0.000000e+00> : vector<16xf32>
    %19 = vector.multi_reduction <add>, %18, %cst_12 [1] : vector<16x128xf32> to vector<16xf32>
    %20 = vector.shape_cast %19 : vector<16xf32> to vector<16x1xf32>
    %cst_13 = arith.constant 7.812500e-03 : f32
    %21 = vector.broadcast %cst_13 : f32 to vector<16x1xf32>
    %22 = arith.mulf %20, %21 : vector<16x1xf32>
    %cst_14 = arith.constant 9.99999974E-6 : f32
    %23 = vector.broadcast %cst_14 : f32 to vector<16x1xf32>
    %24 = arith.addf %22, %23 : vector<16x1xf32>
    %25 = math.rsqrt %24 : vector<16x1xf32>
    %26 = vector.broadcast %25 : vector<16x1xf32> to vector<16x128xf32>
    %27 = arith.mulf %17, %26 : vector<16x128xf32>
    %c1 = arith.constant 1 : index
    %c0_15 = arith.constant 0 : index
    %28 = vector.load %arg5[%c1, %c0_15] : memref<3x128xf32, #tpu.memory_space<vmem>>, vector<1x128xf32>
    %29 = vector.broadcast %28 : vector<1x128xf32> to vector<16x128xf32>
    %30 = arith.mulf %27, %29 : vector<16x128xf32>
    %c2 = arith.constant 2 : index
    %c0_16 = arith.constant 0 : index
    %31 = vector.load %arg5[%c2, %c0_16] : memref<3x128xf32, #tpu.memory_space<vmem>>, vector<1x128xf32>
    %32 = vector.broadcast %31 : vector<1x128xf32> to vector<16x128xf32>
    %33 = arith.addf %30, %32 : vector<16x128xf32>
    %c0_17 = arith.constant 0 : index
    %c0_18 = arith.constant 0 : index
    %34 = vector.load %arg6[%c0_17, %c0_18] : memref<16x128xf32, #tpu.memory_space<vmem>>, vector<16x128xf32>
    tpu.vector_store %arg6[%c0_17, %c0_18], %33 {strides = array<i32>} : memref<16x128xf32, #tpu.memory_space<vmem>>, vector<16x128xf32>,
    return
  }
  func.func @transform_0(%arg0: i32) -> (i32, i32) {
    %c0_i32 = arith.constant 0 : i32
    %c0_i32_0 = arith.constant 0 : i32
    return %arg0, %c0_i32 : i32, i32
  }
  func.func @transform_1(%arg0: i32) -> (i32, i32) {
    %c0_i32 = arith.constant 0 : i32
    %c0_i32_0 = arith.constant 0 : i32
    return %arg0, %c0_i32 : i32, i32
  }
  func.func @transform_2(%arg0: i32) -> (i32, i32) {
    %c0_i32 = arith.constant 0 : i32
    %c0_i32_0 = arith.constant 0 : i32
    %c0_i32_1 = arith.constant 0 : i32
    return %c0_i32, %c0_i32_0 : i32, i32
  }
  func.func @transform_3(%arg0: i32) -> (i32, i32) {
    %c0_i32 = arith.constant 0 : i32
    %c0_i32_0 = arith.constant 0 : i32
    %c0_i32_1 = arith.constant 0 : i32
    return %c0_i32, %c0_i32_0 : i32, i32
  }
  func.func @transform_4(%arg0: i32) -> (i32, i32) {
    %c0_i32 = arith.constant 0 : i32
    %c0_i32_0 = arith.constant 0 : i32
    %c0_i32_1 = arith.constant 0 : i32
    return %c0_i32, %c0_i32_0 : i32, i32
  }
  func.func @transform_5(%arg0: i32) -> (i32, i32) {
    %c0_i32 = arith.constant 0 : i32
    %c0_i32_0 = arith.constant 0 : i32
    return %arg0, %c0_i32 : i32, i32
  }
}

</mosaic_0001>

<llo_original>
// kernel: tpu_custom_call.1
$region0: #{tpu_custom_call.1}
  #allocation0 [shape = 'u32[]', space=smem, size = 0x4, offset = 0x4, fixed_abs, tag = 'smem constant byte address 0x4 - core index']
  #allocation1 [shape = 'u32[144,128]{1,0:T(1,128)}', space=vmem, size = 0x12000, scoped, tag = 'internal scratch']
  %s0 = inlined_call_operand.hbm [shape: f32[16,32], index: 0, kind: input, shape index: {}]
  %s1 = inlined_call_operand.hbm [shape: f32[16,32], index: 1, kind: input, shape index: {}]
  %s2 = inlined_call_operand.hbm [shape: bf16[32,128], index: 2, kind: input, shape index: {}]
  %s3 = inlined_call_operand.hbm [shape: bf16[32,128], index: 3, kind: input, shape index: {}]
  %s4 = inlined_call_operand.vmem [shape: f32[3,128], index: 4, kind: input, shape index: {}]
  %s5 = inlined_call_operand.hbm [shape: f32[16,128], index: 5, kind: output, shape index: {}]
  %s6 = sld [smem:[#allocation0]]
  $region46: #{tpu_custom_call.1} parent=0
    _
  %s8 = ssub.s32 1, %s6
  %s9 = scalar_select 0, %s8, %s6
  $region1: #{tpu_custom_call.1} parent=0
    #allocation2 [shape = 'u8[8192]{0}', space=vmem, size = 0x2000, scoped, tag = 'input window, operand 0, single buffered']
    #allocation3 [shape = 's32[1]{0}', space=sflag, size = 0x4, scoped, tag = 'scoped memory for tpu_custom_call.1']
    #allocation4 [shape = 's32[1]{0}', space=sflag, size = 0x4, scoped, tag = 'scoped memory for tpu_custom_call.1']
    #allocation5 [shape = 'u8[8192]{0}', space=vmem, size = 0x2000, scoped, tag = 'input window, operand 1, single buffered']
    #allocation6 [shape = 's32[1]{0}', space=sflag, size = 0x4, scoped, tag = 'scoped memory for tpu_custom_call.1']
    #allocation7 [shape = 'u8[8192]{0}', space=vmem, size = 0x2000, scoped, tag = 'input window, operand 2, single buffered']
    #allocation8 [shape = 'u8[8192]{0}', space=vmem, size = 0x2000, scoped, tag = 'input window, operand 3, single buffered']
    #allocation9 [shape = 's32[1]{0}', space=sflag, size = 0x4, scoped, tag = 'scoped memory for tpu_custom_call.1']
    #allocation10 [shape = 'u8[8192]{0}', space=vmem, size = 0x2000, scoped, tag = 'output window, operand 0, single buffered']
    %10 = vsyncpa [#allocation3], 0
    %11 = vsyncpa [#allocation6], 0
    %12 = vsyncpa [#allocation9], 0
    %13 = vsyncpa [#allocation4], 0
    // Predicated region
    $region2: #{tpu_custom_call.1} parent=1 // pred_check
      _
    $region3: #{tpu_custom_call.1} parent=1 // pred_check_branch
      %15 = sbr.rel (0) target = $region5
    $region4: #{tpu_custom_call.1} parent=1 // pred_region
      %s17 = ssub.s32 256, 256
      %18 = vsyncadd [#allocation3], %s17
      %s19 = sshll.u32 [#allocation2], 4
      %s20 = int_to_ptr.vmem [resolvable:$true] %s19
      %25 = dma.hbm_to_vmem [thread:$0]  %s0, 256, %s20, [#allocation3], 128, 128, 8
    $region5: #{tpu_custom_call.1} parent=1 // pred_fallthru
      _
    // Predicated region
    $region6: #{tpu_custom_call.1} parent=1 // pred_check
      _
    $region7: #{tpu_custom_call.1} parent=1 // pred_check_branch
      %27 = sbr.rel (0) target = $region9
    $region8: #{tpu_custom_call.1} parent=1 // pred_region
      %s29 = ssub.s32 256, 256
      %30 = vsyncadd [#allocation6], %s29
      %s31 = sshll.u32 [#allocation5], 4
      %s32 = int_to_ptr.vmem [resolvable:$true] %s31
      %37 = dma.hbm_to_vmem [thread:$0]  %s1, 256, %s32, [#allocation6], 128, 128, 8
    $region9: #{tpu_custom_call.1} parent=1 // pred_fallthru
      _
    // Predicated region
    $region10: #{tpu_custom_call.1} parent=1 // pred_check
      _
    $region11: #{tpu_custom_call.1} parent=1 // pred_check_branch
      %39 = sbr.rel (0) target = $region13
    $region12: #{tpu_custom_call.1} parent=1 // pred_region
      %s41 = ssub.s32 256, 256
      %42 = vsyncadd [#allocation6], %s41
      %s43 = sshll.u32 [#allocation7], 4
      %s44 = int_to_ptr.vmem [resolvable:$true] %s43
      %49 = dma.hbm_to_vmem [thread:$0]  %s2, 256, %s44, [#allocation6], 64, 64, 4
    $region13: #{tpu_custom_call.1} parent=1 // pred_fallthru
      _
    // Predicated region
    $region14: #{tpu_custom_call.1} parent=1 // pred_check
      _
    $region15: #{tpu_custom_call.1} parent=1 // pred_check_branch
      %51 = sbr.rel (0) target = $region17
    $region16: #{tpu_custom_call.1} parent=1 // pred_region
      %s53 = ssub.s32 256, 256
      %54 = vsyncadd [#allocation9], %s53
      %s55 = sshll.u32 [#allocation8], 4
      %s56 = int_to_ptr.vmem [resolvable:$true] %s55
      %61 = dma.hbm_to_vmem [thread:$0]  %s3, 256, %s56, [#allocation9], 64, 64, 4
    $region17: #{tpu_custom_call.1} parent=1 // pred_fallthru
      _
    // Predicated region
    $region18: #{tpu_custom_call.1} parent=1 // pred_check
      _
    $region19: #{tpu_custom_call.1} parent=1 // pred_check_branch
      %63 = sbr.rel (0) target = $region21
    $region20: #{tpu_custom_call.1} parent=1 // pred_region
      _
    $region21: #{tpu_custom_call.1} parent=1 // pred_fallthru
      _
    // Predicated region
    $region22: #{tpu_custom_call.1} parent=1 // pred_check
      _
    $region23: #{tpu_custom_call.1} parent=1 // pred_check_branch
      %65 = sbr.rel (0) target = $region25
    $region24: #{tpu_custom_call.1} parent=1 // pred_region
      %66 = dma.done [#allocation3], 256
    $region25: #{tpu_custom_call.1} parent=1 // pred_fallthru
      _
    // Predicated region
    $region26: #{tpu_custom_call.1} parent=1 // pred_check
      _
    $region27: #{tpu_custom_call.1} parent=1 // pred_check_branch
      %68 = sbr.rel (0) target = $region29
    $region28: #{tpu_custom_call.1} parent=1 // pred_region
      %69 = dma.done [#allocation6], 256
    $region29: #{tpu_custom_call.1} parent=1 // pred_fallthru
      _
    // Predicated region
    $region30: #{tpu_custom_call.1} parent=1 // pred_check
      _
    $region31: #{tpu_custom_call.1} parent=1 // pred_check_branch
      %71 = sbr.rel (0) target = $region33
    $region32: #{tpu_custom_call.1} parent=1 // pred_region
      %72 = dma.done [#allocation6], 256
    $region33: #{tpu_custom_call.1} parent=1 // pred_fallthru
      _
    // Predicated region
    $region34: #{tpu_custom_call.1} parent=1 // pred_check
      _
    $region35: #{tpu_custom_call.1} parent=1 // pred_check_branch
      %74 = sbr.rel (0) target = $region37
    $region36: #{tpu_custom_call.1} parent=1 // pred_region
      %75 = dma.done [#allocation9], 256
    $region37: #{tpu_custom_call.1} parent=1 // pred_fallthru
      _
    %v77 = vld [vmem:[#allocation2] sm:$0xff]
    %v78 = vld [vmem:[#allocation2 + $0x8] sm:$0xff]
    %v79 = vpack.c.bf16 %v78, %v77
    %v80 = vld [vmem:[#allocation5] sm:$0xff]
    %v81 = vld [vmem:[#allocation5 + $0x8] sm:$0xff]
    %v82 = vpack.c.bf16 %v81, %v80
    %v83 = vld [vmem:[#allocation7] sm:$0xf]
    %v84 = vld [vmem:[#allocation7 + $0x4] sm:$0xf]
    %v85 = vld [vmem:[#allocation7 + $0x8] sm:$0xf]
    %v86 = vld [vmem:[#allocation7 + $0xc] sm:$0xf]
    %v87 = vld [vmem:[#allocation8] sm:$0xf]
    %v88 = vld [vmem:[#allocation8 + $0x4] sm:$0xf]
    %v89 = vld [vmem:[#allocation8 + $0x8] sm:$0xf]
    %v90 = vld [vmem:[#allocation8 + $0xc] sm:$0xf]
    %v95 = vunpack.c.l.b16 %v87
    %v96 = vunpack.c.l.b16 %v88
    %v97 = vunpack.c.l.b16 %v89
    %v98 = vunpack.c.l.b16 %v90
    %v99 = vpack.c.b16 %v96, %v95
    %v100 = vpack.c.b16 %v98, %v97
    %vm103 = vcmask 261120
    %v105 = vsel %vm103, %v82, 0
    %107 = vmatprep.subr.bf16.mxu0 0
    %108 = vmatpush1.bf16.msra.mxu0 %v99
    %109 = vmatprep.subr.bf16.mxu0 0
    %110 = vmatpush1.bf16.msra.mxu0 %v100
    %111 = vmatprep.subr.bf16.mxu0 0
    %112 = vmatpush1.bf16.msra.mxu0 0
    %113 = vmatprep.subr.bf16.mxu0 0
    %114 = vmatpush1.bf16.msra.mxu0 0
    %115 = vmatprep.subr.bf16.mxu0 0
    %116 = vmatpush1.bf16.msra.mxu0 0
    %117 = vmatprep.subr.bf16.mxu0 0
    %118 = vmatpush1.bf16.msra.mxu0 0
    %119 = vmatprep.subr.bf16.mxu0 0
    %120 = vmatpush1.bf16.msra.mxu0 0
    %121 = vmatprep.subr.bf16.mxu0 0
    %122 = vmatpush1.bf16.msra.mxu0 0
    %123 = vmatprep.subr.bf16.mxu0 0
    %124 = vmatpush1.bf16.msra.mxu0 0
    %125 = vmatprep.subr.bf16.mxu0 0
    %126 = vmatpush1.bf16.msra.mxu0 0
    %127 = vmatprep.subr.bf16.mxu0 0
    %128 = vmatpush1.bf16.msra.mxu0 0
    %129 = vmatprep.subr.bf16.mxu0 0
    %130 = vmatpush1.bf16.msra.mxu0 0
    %131 = vmatprep.subr.bf16.mxu0 0
    %132 = vmatpush1.bf16.msra.mxu0 0
    %133 = vmatprep.subr.bf16.mxu0 0
    %134 = vmatpush1.bf16.msra.mxu0 0
    %135 = vmatprep.subr.bf16.mxu0 0
    %136 = vmatpush1.bf16.msra.mxu0 0
    %137 = vmatprep.subr.bf16.mxu0 0
    %138 = vmatpush1.bf16.msra.mxu0 0
    %139 = vmatprep.mubr.bf16.mxu0 0
    %140 = vmatmul.mubr.bf16.gmra.mrb[0].mxu0 %v105
    %v141 = vpop.f32.mrb[0].mxu0
    %v142 = vadd.f32 0.0, %v141
    %v143 = vpop.f32.mrb[0].mxu0
    %v144 = vpop.f32.mrb[0].mxu0
    %v145 = vadd.f32 0.0, %v144
    %v146 = vpop.f32.mrb[0].mxu0
    %147 = vdwg.mxu0
    %v152 = vunpack.c.l.b16 %v83
    %v153 = vunpack.c.l.b16 %v84
    %v154 = vunpack.c.l.b16 %v85
    %v155 = vunpack.c.l.b16 %v86
    %v156 = vpack.c.b16 %v153, %v152
    %v157 = vpack.c.b16 %v155, %v154
    %v161 = vsel %vm103, %v79, 0
    %163 = vmatprep.subr.bf16.mxu0 0
    %164 = vmatpush1.bf16.msra.mxu0 %v156
    %165 = vmatprep.subr.bf16.mxu0 0
    %166 = vmatpush1.bf16.msra.mxu0 %v157
    %167 = vmatprep.subr.bf16.mxu0 0
    %168 = vmatpush1.bf16.msra.mxu0 0
    %169 = vmatprep.subr.bf16.mxu0 0
    %170 = vmatpush1.bf16.msra.mxu0 0
    %171 = vmatprep.subr.bf16.mxu0 0
    %172 = vmatpush1.bf16.msra.mxu0 0
    %173 = vmatprep.subr.bf16.mxu0 0
    %174 = vmatpush1.bf16.msra.mxu0 0
    %175 = vmatprep.subr.bf16.mxu0 0
    %176 = vmatpush1.bf16.msra.mxu0 0
    %177 = vmatprep.subr.bf16.mxu0 0
    %178 = vmatpush1.bf16.msra.mxu0 0
    %179 = vmatprep.subr.bf16.mxu0 0
    %180 = vmatpush1.bf16.msra.mxu0 0
    %181 = vmatprep.subr.bf16.mxu0 0
    %182 = vmatpush1.bf16.msra.mxu0 0
    %183 = vmatprep.subr.bf16.mxu0 0
    %184 = vmatpush1.bf16.msra.mxu0 0
    %185 = vmatprep.subr.bf16.mxu0 0
    %186 = vmatpush1.bf16.msra.mxu0 0
    %187 = vmatprep.subr.bf16.mxu0 0
    %188 = vmatpush1.bf16.msra.mxu0 0
    %189 = vmatprep.subr.bf16.mxu0 0
    %190 = vmatpush1.bf16.msra.mxu0 0
    %191 = vmatprep.subr.bf16.mxu0 0
    %192 = vmatpush1.bf16.msra.mxu0 0
    %193 = vmatprep.subr.bf16.mxu0 0
    %194 = vmatpush1.bf16.msra.mxu0 0
    %195 = vmatprep.mubr.bf16.mxu0 0
    %196 = vmatmul.mubr.bf16.gmra.mrb[0].mxu0 %v161
    %v197 = vpop.f32.mrb[0].mxu0
    %v198 = vadd.f32 %v142, %v197
    %v199 = vpop.f32.mrb[0].mxu0
    %v200 = vpop.f32.mrb[0].mxu0
    %v201 = vadd.f32 %v145, %v200
    %v202 = vpop.f32.mrb[0].mxu0
    %203 = vdwg.mxu0
    %v204 = vld [vmem:[%s4] sm:$0x1]
    %v205 = vlaneseq
    %v206 = vshrl.u32 %v205, 7
    %v207 = vsub.s32 0, %v206
    %v208 = vrot.slane %v204, %v207
    %v209 = vadd.f32 %v198, %v208
    %v210 = vadd.f32 %v201, %v208
    %211 = vadd.xlane.f32.xlu0 %v209
    %v212 = vpop.xlane.xlu0 %211
    %213 = vadd.xlane.f32.xlu0 %v210
    %v214 = vpop.xlane.xlu0 %213
    %v215 = vmul.f32 %v212, 0.0078125
    %v216 = vmul.f32 %v214, 0.0078125
    %v217 = vsub.f32 %v209, %v215
    %v218 = vsub.f32 %v210, %v216
    %v219 = vmul.f32 %v217, %v217
    %v220 = vmul.f32 %v218, %v218
    %221 = vadd.xlane.f32.xlu0 %v219
    %v222 = vpop.xlane.xlu0 %221
    %223 = vadd.xlane.f32.xlu0 %v220
    %v224 = vpop.xlane.xlu0 %223
    %v225 = vmul.f32 %v222, 0.0078125
    %v226 = vmul.f32 %v224, 0.0078125
    %v227 = vadd.f32 %v225, 1e-05
    %v228 = vadd.f32 %v226, 1e-05
    %v229 = vrsqrt.pop %v227
    %v230 = vrsqrt.pop %v228
    %v231 = vmul.f32 %v217, %v229
    %v232 = vmul.f32 %v218, %v230
    %v233 = vld [vmem:[%s4 + $0x1] sm:$0x1]
    %v234 = vlaneseq
    %v235 = vshrl.u32 %v234, 7
    %v236 = vsub.s32 0, %v235
    %v237 = vrot.slane %v233, %v236
    %v238 = vmul.f32 %v231, %v237
    %v239 = vmul.f32 %v232, %v237
    %v240 = vld [vmem:[%s4 + $0x2] sm:$0x1]
    %v241 = vlaneseq
    %v242 = vshrl.u32 %v241, 7
    %v243 = vsub.s32 0, %v242
    %v244 = vrot.slane %v240, %v243
    %v245 = vadd.f32 %v238, %v244
    %v246 = vadd.f32 %v239, %v244
    %247 = vst [vmem:[#allocation10] sm:$0xff] %v245
    %248 = vst [vmem:[#allocation10 + $0x8] sm:$0xff] %v246
    // Predicated region
    $region38: #{tpu_custom_call.1} parent=1 // pred_check
      _
    $region39: #{tpu_custom_call.1} parent=1 // pred_check_branch
      %250 = sbr.rel (0) target = $region41
    $region40: #{tpu_custom_call.1} parent=1 // pred_region
      %s252 = ssub.s32 256, 256
      %253 = vsyncadd [#allocation4], %s252
      %s254 = sshll.u32 [#allocation10], 4
      %s255 = int_to_ptr.vmem [resolvable:$true] %s254
      %260 = dma.vmem_to_hbm [thread:$0]  %s255, 256, %s5, [#allocation4], 128, 128, 8
    $region41: #{tpu_custom_call.1} parent=1 // pred_fallthru
      _
    // Predicated region
    $region42: #{tpu_custom_call.1} parent=1 // pred_check
      _
    $region43: #{tpu_custom_call.1} parent=1 // pred_check_branch
      %262 = sbr.rel (0) target = $region45
    $region44: #{tpu_custom_call.1} parent=1 // pred_region
      %263 = dma.done [#allocation4], 256
    $region45: #{tpu_custom_call.1} parent=1 // pred_fallthru
      _
    %264 = vsyncpa [#allocation3], 1
    %265 = vsyncpa [#allocation6], 1
    %266 = vsyncpa [#allocation9], 1
    %267 = vsyncpa [#allocation4], 1

</llo_original>
